<compile_context>
chip_gen: v7x
topology: tpu7x:2x2x1
jax: 0.10.0
libtpu: 0.0.40
codegen_flags: <defaults>
</compile_context>

<pallas_src>
import functools

import jax
import jax.numpy as jnp
from jax.experimental import pallas as pl
from jax.experimental.pallas import tpu as pltpu


_TARGET_BLOCK_BYTES = 2 * 1024 * 1024          # aim for ~2 MiB input blocks
_MAX_SINGLE_PASS_BLOCK_BYTES = 4 * 1024 * 1024  # above this, use the two-pass path
_VMEM_LIMIT_BYTES = 32 * 1024 * 1024            # safe scoped limit on v5e/v6e/v7x


# ---------------------------------------------------------------------------
# tiling helpers
# ---------------------------------------------------------------------------

def _largest_divisor_leq(n, cap):
    cap = int(max(1, min(cap, n)))
    for d in range(cap, 0, -1):
        if n % d == 0:
            return d
    return 1


def _pick_batch_tile(n, row_bytes, target_bytes, keep_two_steps=True):
    """Samples per block: big enough for DMA efficiency, >=2 grid steps."""
    bn = max(1, int(target_bytes // max(1, row_bytes)))
    bn = min(bn, n)
    if keep_two_steps and n >= 2:
        bn = min(bn, max(1, n // 2))   # keep >=2 grid steps (v7x has 2 TCs)
    return _largest_divisor_leq(n, bn)


def _pick_hw_tile(hw, c, itemsize, target_bytes):
    """HW tile: a multiple of 128 that divides HW (lane-dense stores)."""
    if hw % 128 != 0:
        # TODO(synk): for huge HW that is not a multiple of 128, a masked
        # reduction tile would be needed; here we keep the full lane axis.
        return hw
    n128 = hw // 128
    cap = max(1, int(target_bytes // max(1, c * 128 * itemsize)))
    return _largest_divisor_leq(n128, cap) * 128


# ---------------------------------------------------------------------------
# fused single-pass kernel (whole (C, HW) slab per sample fits VMEM)
# ---------------------------------------------------------------------------

def _sga_fused_kernel(x_ref, alpha_ref, beta_ref, o_ref, *, epsilon):
    # x_ref: (BN, C, HW);  alpha_ref/beta_ref: (1, C, 1)
    x = x_ref[...]
    xf = x.astype(jnp.float32)
    alpha = alpha_ref[...]                                  # (1, C, 1)
    beta = beta_ref[...]                                    # (1, C, 1)

    ss = jnp.sum(xf * xf, axis=-1, keepdims=True)           # (BN, C, 1)
    embedding = jnp.sqrt(ss + epsilon) * alpha              # (BN, C, 1)
    norm = jnp.sqrt(
        jnp.mean(embedding * embedding, axis=1, keepdims=True) + epsilon
    )                                                       # (BN, 1, 1)
    gate = jnp.tanh(embedding * norm + beta)                # (BN, C, 1)
    o_ref[...] = x + gate.astype(x.dtype)                   # broadcast over HW


def _sga_forward_fused(x, alpha3, beta3, epsilon):
    n, c, hw = x.shape
    itemsize = jnp.dtype(x.dtype).itemsize
    bn = _pick_batch_tile(n, c * hw * itemsize, _TARGET_BLOCK_BYTES)

    kernel = functools.partial(_sga_fused_kernel, epsilon=float(epsilon))
    cost = pl.CostEstimate(
        flops=3 * n * c * hw,
        transcendentals=3 * n * c,
        bytes_accessed=2 * n * c * hw * itemsize + 2 * c * 4,
    )
    return pl.pallas_call(
        kernel,
        out_shape=jax.ShapeDtypeStruct((n, c, hw), x.dtype),
        grid_spec=pltpu.PrefetchScalarGridSpec(
            num_scalar_prefetch=0,
            grid=(n // bn,),
            in_specs=[
                pl.BlockSpec((bn, c, hw), lambda i: (i, 0, 0)),
                pl.BlockSpec((1, c, 1), lambda i: (0, 0, 0)),
                pl.BlockSpec((1, c, 1), lambda i: (0, 0, 0)),
            ],
            out_specs=pl.BlockSpec((bn, c, hw), lambda i: (i, 0, 0)),
        ),
        compiler_params=pltpu.CompilerParams(
            dimension_semantics=("parallel",),
            vmem_limit_bytes=_VMEM_LIMIT_BYTES,
        ),
        cost_estimate=cost,
    )(x, alpha3, beta3)


# ---------------------------------------------------------------------------
# two-pass path for large feature maps (C*HW slab would not fit VMEM)
# ---------------------------------------------------------------------------

def _sga_sumsq_kernel(x_ref, ss_ref):
    # Accumulate sum(x^2) over the HW-tile (arbitrary) grid axis.
    @pl.when(pl.program_id(1) == 0)
    def _():
        ss_ref[...] = jnp.zeros_like(ss_ref)

    xf = x_ref[...].astype(jnp.float32)
    ss_ref[...] += jnp.sum(xf * xf, axis=-1, keepdims=True)


def _sga_add_gate_kernel(x_ref, gate_ref, o_ref):
    o_ref[...] = x_ref[...] + gate_ref[...]                 # broadcast over HW


def _sga_forward_two_pass(x, alpha2, beta2, epsilon,
                          target_block_bytes=_TARGET_BLOCK_BYTES):
    n, c, hw = x.shape
    itemsize = jnp.dtype(x.dtype).itemsize
    thw = _pick_hw_tile(hw, c, itemsize, target_block_bytes)
    bn = _pick_batch_tile(n, c * thw * itemsize, target_block_bytes)

    # Pass 1: ss[n, c] = sum_{HW} x^2   (reduction axis last in grid)
    ss = pl.pallas_call(
        _sga_sumsq_kernel,
        out_shape=jax.ShapeDtypeStruct((n, c, 1), jnp.float32),
        grid_spec=pltpu.PrefetchScalarGridSpec(
            num_scalar_prefetch=0,
            grid=(n // bn, hw // thw),
            in_specs=[pl.BlockSpec((bn, c, thw), lambda i, k: (i, 0, k))],
            out_specs=pl.BlockSpec((bn, c, 1), lambda i, k: (i, 0, 0)),
        ),
        compiler_params=pltpu.CompilerParams(
            dimension_semantics=("parallel", "arbitrary"),
            vmem_limit_bytes=_VMEM_LIMIT_BYTES,
        ),
        cost_estimate=pl.CostEstimate(
            flops=2 * n * c * hw,
            transcendentals=0,
            bytes_accessed=n * c * hw * itemsize + n * c * 4,
        ),
    )(x)

    # Tiny (N, C) gate math in plain JAX -- negligible work.
    embedding = jnp.sqrt(ss[:, :, 0] + epsilon) * alpha2            # (N, C)
    norm = jnp.sqrt(jnp.mean(embedding * embedding, axis=1, keepdims=True)
                    + epsilon)                                       # (N, 1)
    gate = jnp.tanh(embedding * norm + beta2).astype(x.dtype)        # (N, C)
    gate = gate[:, :, None]                                          # (N, C, 1)

    # Pass 2: out = x + gate, fully parallel grid.
    return pl.pallas_call(
        _sga_add_gate_kernel,
        out_shape=jax.ShapeDtypeStruct((n, c, hw), x.dtype),
        grid_spec=pltpu.PrefetchScalarGridSpec(
            num_scalar_prefetch=0,
            grid=(n // bn, hw // thw),
            in_specs=[
                pl.BlockSpec((bn, c, thw), lambda i, k: (i, 0, k)),
                pl.BlockSpec((bn, c, 1), lambda i, k: (i, 0, 0)),
            ],
            out_specs=pl.BlockSpec((bn, c, thw), lambda i, k: (i, 0, k)),
        ),
        compiler_params=pltpu.CompilerParams(
            dimension_semantics=("parallel", "parallel"),
            vmem_limit_bytes=_VMEM_LIMIT_BYTES,
        ),
        cost_estimate=pl.CostEstimate(
            flops=n * c * hw,
            transcendentals=0,
            bytes_accessed=2 * n * c * hw * itemsize,
        ),
    )(x, gate)


# ---------------------------------------------------------------------------
# public wrapper + reference
# ---------------------------------------------------------------------------

def sga_forward(x_nchw, alpha, beta, epsilon=1e-5):
    """x_nchw: (N, C, H, W); alpha/beta: (1, C, 1, 1). Matches SGA.forward."""
    n, c, h, w = x_nchw.shape
    hw = h * w
    x = x_nchw.reshape(n, c, hw)

    itemsize = jnp.dtype(x.dtype).itemsize
    per_sample_bytes = c * hw * itemsize
    if per_sample_bytes <= _MAX_SINGLE_PASS_BLOCK_BYTES:
        out = _sga_forward_fused(
            x, jnp.reshape(alpha, (1, c, 1)), jnp.reshape(beta, (1, c, 1)),
            epsilon)
    else:
        out = _sga_forward_two_pass(
            x, jnp.reshape(alpha, (1, c)), jnp.reshape(beta, (1, c)), epsilon)
    return out.reshape(n, c, h, w)


def sga_reference(x, alpha, beta, epsilon=1e-5):
    """Pure-JAX reference mirroring the PyTorch forward."""
    embedding = jnp.sqrt(jnp.sum(x ** 2, axis=(2, 3), keepdims=True)
                         + epsilon) * alpha
    norm = jnp.sqrt(jnp.mean(embedding ** 2, axis=1, keepdims=True) + epsilon)
    gate = jnp.tanh(embedding * norm + beta)
    return x + gate


if __name__ == "__main__":
    key = jax.random.PRNGKey(0)
    N, C, H, W = 2, 4, 16, 16

    kx, ka, kb = jax.random.split(key, 3)
    x = jax.random.normal(kx, (N, C, H, W), dtype=jnp.float32)
    # Deterministic parameter init matching nn.Parameter(ones/zeros), lightly
    # perturbed so alpha/beta actually matter.
    alpha = (jnp.ones((1, C, 1, 1), jnp.float32)
             + 0.1 * jax.random.normal(ka, (1, C, 1, 1), jnp.float32))
    beta = (jnp.zeros((1, C, 1, 1), jnp.float32)
            + 0.1 * jax.random.normal(kb, (1, C, 1, 1), jnp.float32))

    ref = sga_reference(x, alpha, beta)

    # Primary (fused) path.
    out = jax.block_until_ready(sga_forward(x, alpha, beta))
    assert out.shape == (N, C, H, W)
    assert jnp.allclose(out, ref, atol=1e-5, rtol=1e-5), (
        float(jnp.max(jnp.abs(out - ref))))

    # Exercise the two-pass (large-feature-map) path on the same small input
    # with a tiny tile budget so the HW reduction actually spans several tiles.
    out2 = jax.block_until_ready(
        _sga_forward_two_pass(
            x.reshape(N, C, H * W),
            alpha.reshape(1, C), beta.reshape(1, C),
            1e-5, target_block_bytes=2048))
    assert jnp.allclose(out2.reshape(N, C, H, W), ref, atol=1e-5, rtol=1e-5), (
        float(jnp.max(jnp.abs(out2.reshape(N, C, H, W) - ref))))

    print("KERNEL_OK")
</pallas_src>

<mosaic_0001>
module attributes {stable_mosaic.version = 11 : i64} {
  func.func @_sga_fused_kernel(%arg0: i32, %arg1: memref<1x4x256xf32, #tpu.memory_space<vmem>>, %arg2: memref<1x4x1xf32, #tpu.memory_space<vmem>>, %arg3: memref<1x4x1xf32, #tpu.memory_space<vmem>>, %arg4: memref<1x4x256xf32, #tpu.memory_space<vmem>>) attributes {dimension_semantics = [#tpu.dimension_semantics<parallel>], iteration_bounds = array<i64: 2>, scalar_prefetch = 0 : i64, scratch_operands = 0 : i64, tpu.core_type = #tpu.core_type<tc>, window_params = [{transform_indices = @transform_0, window_bounds = array<i64: 1, 4, 256>}, {pipeline_mode = #tpu.pipeline_mode<synchronous>, transform_indices = @transform_1, window_bounds = array<i64: 1, 4, 1>}, {pipeline_mode = #tpu.pipeline_mode<synchronous>, transform_indices = @transform_2, window_bounds = array<i64: 1, 4, 1>}, {transform_indices = @transform_3, window_bounds = array<i64: 1, 4, 256>}]} {
    %c0 = arith.constant 0 : index
    %c0_0 = arith.constant 0 : index
    %c0_1 = arith.constant 0 : index
    %0 = vector.load %arg1[%c0, %c0_0, %c0_1] : memref<1x4x256xf32, #tpu.memory_space<vmem>>, vector<1x4x256xf32>
    %c0_2 = arith.constant 0 : index
    %c0_3 = arith.constant 0 : index
    %c0_4 = arith.constant 0 : index
    %1 = vector.load %arg2[%c0_2, %c0_3, %c0_4] : memref<1x4x1xf32, #tpu.memory_space<vmem>>, vector<1x4x1xf32>
    %c0_5 = arith.constant 0 : index
    %c0_6 = arith.constant 0 : index
    %c0_7 = arith.constant 0 : index
    %2 = vector.load %arg3[%c0_5, %c0_6, %c0_7] : memref<1x4x1xf32, #tpu.memory_space<vmem>>, vector<1x4x1xf32>
    %3 = arith.mulf %0, %0 : vector<1x4x256xf32>
    %cst = arith.constant dense<0.000000e+00> : vector<1x4xf32>
    %4 = vector.multi_reduction <add>, %3, %cst [2] : vector<1x4x256xf32> to vector<1x4xf32>
    %5 = vector.shape_cast %4 : vector<1x4xf32> to vector<1x4x1xf32>
    %cst_8 = arith.constant 9.99999974E-6 : f32
    %6 = vector.broadcast %cst_8 : f32 to vector<1x4x1xf32>
    %7 = arith.addf %5, %6 : vector<1x4x1xf32>
    %8 = math.sqrt %7 : vector<1x4x1xf32>
    %9 = arith.mulf %8, %1 : vector<1x4x1xf32>
    %10 = arith.mulf %9, %9 : vector<1x4x1xf32>
    %cst_9 = arith.constant dense<0.000000e+00> : vector<1x1xf32>
    %11 = vector.multi_reduction <add>, %10, %cst_9 [1] : vector<1x4x1xf32> to vector<1x1xf32>
    %12 = vector.shape_cast %11 : vector<1x1xf32> to vector<1x1x1xf32>
    %cst_10 = arith.constant 4.000000e+00 : f32
    %13 = vector.broadcast %cst_10 : f32 to vector<1x1x1xf32>
    %14 = arith.divf %12, %13 : vector<1x1x1xf32>
    %cst_11 = arith.constant 9.99999974E-6 : f32
    %15 = vector.broadcast %cst_11 : f32 to vector<1x1x1xf32>
    %16 = arith.addf %14, %15 : vector<1x1x1xf32>
    %17 = math.sqrt %16 : vector<1x1x1xf32>
    %18 = vector.broadcast %17 : vector<1x1x1xf32> to vector<1x4x1xf32>
    %19 = arith.mulf %9, %18 : vector<1x4x1xf32>
    %20 = arith.addf %19, %2 : vector<1x4x1xf32>
    %21 = math.tanh %20 : vector<1x4x1xf32>
    %22 = vector.broadcast %21 : vector<1x4x1xf32> to vector<1x4x256xf32>
    %23 = arith.addf %0, %22 : vector<1x4x256xf32>
    %c0_12 = arith.constant 0 : index
    %c0_13 = arith.constant 0 : index
    %c0_14 = arith.constant 0 : index
    %24 = vector.load %arg4[%c0_12, %c0_13, %c0_14] : memref<1x4x256xf32, #tpu.memory_space<vmem>>, vector<1x4x256xf32>
    tpu.vector_store %arg4[%c0_12, %c0_13, %c0_14], %23 {strides = array<i32>} : memref<1x4x256xf32, #tpu.memory_space<vmem>>, vector<1x4x256xf32>,
    return
  }
  func.func @transform_0(%arg0: i32) -> (i32, i32, i32) {
    %c0_i32 = arith.constant 0 : i32
    %c0_i32_0 = arith.constant 0 : i32
    %c0_i32_1 = arith.constant 0 : i32
    return %arg0, %c0_i32, %c0_i32_0 : i32, i32, i32
  }
  func.func @transform_1(%arg0: i32) -> (i32, i32, i32) {
    %c0_i32 = arith.constant 0 : i32
    %c0_i32_0 = arith.constant 0 : i32
    %c0_i32_1 = arith.constant 0 : i32
    %c0_i32_2 = arith.constant 0 : i32
    return %c0_i32, %c0_i32_0, %c0_i32_1 : i32, i32, i32
  }
  func.func @transform_2(%arg0: i32) -> (i32, i32, i32) {
    %c0_i32 = arith.constant 0 : i32
    %c0_i32_0 = arith.constant 0 : i32
    %c0_i32_1 = arith.constant 0 : i32
    %c0_i32_2 = arith.constant 0 : i32
    return %c0_i32, %c0_i32_0, %c0_i32_1 : i32, i32, i32
  }
  func.func @transform_3(%arg0: i32) -> (i32, i32, i32) {
    %c0_i32 = arith.constant 0 : i32
    %c0_i32_0 = arith.constant 0 : i32
    %c0_i32_1 = arith.constant 0 : i32
    return %arg0, %c0_i32, %c0_i32_0 : i32, i32, i32
  }
}

</mosaic_0001>

<llo_original>
// kernel: tpu_custom_call.1
$region0: #{tpu_custom_call.1}
  #allocation0 [shape = 'u32[]', space=smem, size = 0x4, offset = 0x4, fixed_abs, tag = 'smem constant byte address 0x4 - core index']
  #allocation1 [shape = 'u32[144,128]{1,0:T(1,128)}', space=vmem, size = 0x12000, scoped, tag = 'internal scratch']
  %s0 = inlined_call_operand.hbm [shape: f32[2,4,256], index: 0, kind: input, shape index: {}]
  %s1 = inlined_call_operand.vmem [shape: f32[1,4,1], index: 1, kind: input, shape index: {}]
  %s2 = inlined_call_operand.vmem [shape: f32[1,4,1], index: 2, kind: input, shape index: {}]
  %s3 = inlined_call_operand.hbm [shape: f32[2,4,256], index: 3, kind: output, shape index: {}]
  %s4 = sld [smem:[#allocation0]]
  $region49: #{tpu_custom_call.1} parent=0
    _
  %s6 = ssub.s32 1, %s4
  %s7 = scalar_select 0, %s6, %s4
  $region1: #{tpu_custom_call.1} parent=0
    #allocation2 [shape = 'u8[8192]{0}', space=vmem, size = 0x2000, scoped, tag = 'input window, operand 0']
    #allocation3 [shape = 's32[2]{0}', space=sflag, size = 0x8, scoped, tag = 'scoped memory for tpu_custom_call.1']
    #allocation4 [shape = 's32[2]{0}', space=sflag, size = 0x8, scoped, tag = 'scoped memory for tpu_custom_call.1']
    #allocation5 [shape = 'u8[8192]{0}', space=vmem, size = 0x2000, scoped, tag = 'output window, operand 0']
    %8 = vsyncpa [#allocation3], 0
    %s9 = scalar_lea.sflag [#allocation3], 1
    %10 = vsyncpa %s9, 0
    %11 = vsyncpa [#allocation4], 0
    %s12 = scalar_lea.sflag [#allocation4], 1
    %13 = vsyncpa %s12, 0
    loop: start=0, step=1, limit=4
    $region2: #{tpu_custom_call.1} parent=1 // loop_pre_header
      _
    $region3: #{tpu_custom_call.1} parent=1 // loop_header
      %s15 = sphi 0, %s19
      %p16 = scmp.ge.s32.totalorder %s15, 4
      %s25 = sphi 0, %s27
      %s28 = sphi 0, %s25
      %s29 = sphi 0, %s28
      %s45 = sphi 0, %s29
      %s49 = sphi 0, %s49
      %s51 = sphi 0, %s49
      %s52 = sphi 0, %s51
      %s66 = sphi 0, %s52
      %s70 = sphi 0, %s70
      %s72 = sphi 0, %s70
      %s73 = sphi 0, %s72
      %s87 = sphi 0, %s73
      %s93 = sphi 0, %s95
      %s96 = sphi 0, %s93
      %s97 = sphi 0, %s96
      %s113 = sphi 0, %s97
    $region4: #{tpu_custom_call.1} parent=1 // loop_header_branch
      %18 = sbr.rel (%p16) target = $region8
    $region5: #{tpu_custom_call.1} parent=1 // loop_body
      %s20 = ssub.s32 %s15, 1
      %s21 = ssub.s32 %s15, 2
      %s22 = sadd.s32 %s15, 1
      %s23 = ssub.s32 %s15, %s22
      %p24 = scmp.eq.s32.totalorder %s23, 0
      %s26 = sadd.s32 %s25, 1
      %s27 = scalar_select %p24, %s25, %s26
      %p30 = pneg %p24
      %p31 = scmp.eq.s32.totalorder %s15, 1
      %p32 = por %p30, %p31
      %p33 = scmp.ne.s32.totalorder %s25, %s28
      %p34 = scmp.eq.s32.totalorder %s15, 0
      %p35 = por %p33, %p34
      %p36 = scmp.ne.s32.totalorder %s25, %s28
      %p37 = scmp.eq.s32.totalorder %s20, 1
      %p38 = por %p36, %p37
      %p39 = scmp.ne.s32.totalorder %s28, %s29
      %p40 = scmp.eq.s32.totalorder %s20, 0
      %p41 = por %p39, %p40
      %p42 = scmp.ne.s32.totalorder %s28, %s29
      %p43 = scmp.eq.s32.totalorder %s21, 1
      %p44 = por %p42, %p43
      %p46 = scmp.ne.s32.totalorder %s29, %s45
      %p47 = scmp.eq.s32.totalorder %s21, 0
      %p48 = por %p46, %p47
      %s50 = sadd.s32 %s49, 1
      %p53 = scmp.eq.s32.totalorder %s15, 1
      %p54 = scmp.ne.s32.totalorder %s49, %s51
      %p55 = scmp.eq.s32.totalorder %s15, 0
      %p56 = por %p54, %p55
      %p57 = scmp.ne.s32.totalorder %s49, %s51
      %p58 = scmp.eq.s32.totalorder %s20, 1
      %p59 = por %p57, %p58
      %p60 = scmp.ne.s32.totalorder %s51, %s52
      %p61 = scmp.eq.s32.totalorder %s20, 0
      %p62 = por %p60, %p61
      %p63 = scmp.ne.s32.totalorder %s51, %s52
      %p64 = scmp.eq.s32.totalorder %s21, 1
      %p65 = por %p63, %p64
      %p67 = scmp.ne.s32.totalorder %s52, %s66
      %p68 = scmp.eq.s32.totalorder %s21, 0
      %p69 = por %p67, %p68
      %s71 = sadd.s32 %s70, 1
      %p74 = scmp.eq.s32.totalorder %s15, 1
      %p75 = scmp.ne.s32.totalorder %s70, %s72
      %p76 = scmp.eq.s32.totalorder %s15, 0
      %p77 = por %p75, %p76
      %p78 = scmp.ne.s32.totalorder %s70, %s72
      %p79 = scmp.eq.s32.totalorder %s20, 1
      %p80 = por %p78, %p79
      %p81 = scmp.ne.s32.totalorder %s72, %s73
      %p82 = scmp.eq.s32.totalorder %s20, 0
      %p83 = por %p81, %p82
      %p84 = scmp.ne.s32.totalorder %s72, %s73
      %p85 = scmp.eq.s32.totalorder %s21, 1
      %p86 = por %p84, %p85
      %p88 = scmp.ne.s32.totalorder %s73, %s87
      %p89 = scmp.eq.s32.totalorder %s21, 0
      %p90 = por %p88, %p89
      %s91 = ssub.s32 %s15, %s22
      %p92 = scmp.eq.s32.totalorder %s91, 0
      %s94 = sadd.s32 %s93, 1
      %s95 = scalar_select %p92, %s93, %s94
      %p98 = pneg %p92
      %p99 = scmp.eq.s32.totalorder %s15, 1
      %p100 = por %p98, %p99
      %p101 = scmp.ne.s32.totalorder %s93, %s96
      %p102 = scmp.eq.s32.totalorder %s15, 0
      %p103 = por %p101, %p102
      %p104 = scmp.ne.s32.totalorder %s93, %s96
      %p105 = scmp.eq.s32.totalorder %s20, 1
      %p106 = por %p104, %p105
      %p107 = scmp.ne.s32.totalorder %s96, %s97
      %p108 = scmp.eq.s32.totalorder %s20, 0
      %p109 = por %p107, %p108
      %p110 = scmp.ne.s32.totalorder %s96, %s97
      %p111 = scmp.eq.s32.totalorder %s21, 1
      %p112 = por %p110, %p111
      %p114 = scmp.ne.s32.totalorder %s97, %s113
      %p115 = scmp.eq.s32.totalorder %s21, 0
      %p116 = por %p114, %p115
      %p117 = scmp.le.s32.totalorder 1, %s15
      %p118 = scmp.lt.s32.totalorder %s15, 3
      %p119 = pnand %p117, %p118
      %p120 = pneg %p119
      // Predicated region
      $region9: #{tpu_custom_call.1} parent=5 // pred_check
        _
      $region10: #{tpu_custom_call.1} parent=5 // pred_check_branch
        %122 = sbr.rel (%p119) target = $region12
      $region11: #{tpu_custom_call.1} parent=5 // pred_region
        %s123 = ssub.s32 %s15, 1
        // Predicated region
        $region13: #{tpu_custom_call.1} parent=11 // pred_check
          %p124 = pneg %p62
        $region14: #{tpu_custom_call.1} parent=11 // pred_check_branch
          %126 = sbr.rel (%p124) target = $region16
        $region15: #{tpu_custom_call.1} parent=11 // pred_region
          _
        $region16: #{tpu_custom_call.1} parent=11 // pred_fallthru
          _
        // Predicated region
        $region17: #{tpu_custom_call.1} parent=11 // pred_check
          %p127 = pneg %p83
        $region18: #{tpu_custom_call.1} parent=11 // pred_check_branch
          %129 = sbr.rel (%p127) target = $region20
        $region19: #{tpu_custom_call.1} parent=11 // pred_region
          _
        $region20: #{tpu_custom_call.1} parent=11 // pred_fallthru
          _
      $region12: #{tpu_custom_call.1} parent=5 // pred_fallthru
        _
      %p130 = scmp.lt.s32.totalorder %s15, 2
      // Predicated region
      $region21: #{tpu_custom_call.1} parent=5 // pred_check
        %p131 = pneg %p130
      $region22: #{tpu_custom_call.1} parent=5 // pred_check_branch
        %133 = sbr.rel (%p131) target = $region24
      $region23: #{tpu_custom_call.1} parent=5 // pred_region
        // Predicated region
        $region25: #{tpu_custom_call.1} parent=23 // pred_check
          %p134 = pneg %p35
        $region26: #{tpu_custom_call.1} parent=23 // pred_check_branch
          %136 = sbr.rel (%p134) target = $region28
        $region27: #{tpu_custom_call.1} parent=23 // pred_region
          %s137 = sand.u32 %s25, 1
          %s138 = scalar_lea.sflag [#allocation3], %s137
          %s139 = sand.u32 %s25, 1
          %s140 = smul.addr %s139, 8
          %s141 = scalar_lea.vmem [#allocation2], %s140
          %s143 = ssub.s32 128, 128
          %144 = vsyncadd %s138, %s143
          %s145 = smul.addr %s15, 2
          %s146 = smul.addr %s145, 64
          %s147 = scalar_lea.hbm %s0, %s146
          %s149 = sshll.u32 %s141, 4
          %s150 = int_to_ptr.vmem [resolvable:$true] %s149
          %152 = dma.hbm_to_vmem [thread:$0]  %s147, 128, %s150, %s138
        $region28: #{tpu_custom_call.1} parent=23 // pred_fallthru
          _
      $region24: #{tpu_custom_call.1} parent=5 // pred_fallthru
        _
      %p153 = scmp.le.s32.totalorder 1, %s15
      %p154 = scmp.lt.s32.totalorder %s15, 3
      %p155 = pnand %p153, %p154
      %p156 = pneg %p155
      // Predicated region
      $region29: #{tpu_custom_call.1} parent=5 // pred_check
        _
      $region30: #{tpu_custom_call.1} parent=5 // pred_check_branch
        %158 = sbr.rel (%p155) target = $region32
      $region31: #{tpu_custom_call.1} parent=5 // pred_region
        %s159 = ssub.s32 %s15, 1
        %s160 = sand.u32 %s28, 1
        %s161 = scalar_lea.sflag [#allocation3], %s160
        %s162 = sand.u32 %s28, 1
        %s163 = smul.addr %s162, 8
        %s164 = scalar_lea.vmem [#allocation2], %s163
        // Predicated region
        $region33: #{tpu_custom_call.1} parent=31 // pred_check
          %p165 = pneg %p41
        $region34: #{tpu_custom_call.1} parent=31 // pred_check_branch
          %167 = sbr.rel (%p165) target = $region36
        $region35: #{tpu_custom_call.1} parent=31 // pred_region
          %168 = dma.done %s161, 128
        $region36: #{tpu_custom_call.1} parent=31 // pred_fallthru
          _
        %s169 = sand.u32 %s28, 1
        %s170 = scalar_lea.sflag [#allocation3], %s169
        %s171 = sand.u32 %s28, 1
        %s172 = smul.addr %s171, 8
        %s173 = scalar_lea.vmem [#allocation2], %s172
        %p174 = pneg %p41
        %p175 = pneg %p38
        %p176 = pneg %p62
        %p177 = pneg %p59
        %p178 = pneg %p83
        %p179 = pneg %p80
        %p180 = pneg %p109
        %p181 = pneg %p106
        %s182 = sand.u32 %s96, 1
        %s183 = scalar_lea.sflag [#allocation4], %s182
        %s184 = sand.u32 %s96, 1
        %s185 = smul.addr %s184, 8
        %s186 = scalar_lea.vmem [#allocation5], %s185
        %v187 = vld [vmem:[%s164] sm:$0xff]
        %v188 = vld [vmem:[%s1] sm:$0xf]
        %v189 = vld [vmem:[%s2] sm:$0xf]
        %v190 = vmul.f32 %v187, %v187
        %v192 = vcombine.high %v190, %v190
        %vm194 = vcmask 1043456
        %v195 = vsel %vm194, %v190, 0.0
        %v196 = vsel %vm194, %v192, 0.0
        %v197 = vadd.f32 %v195, %v196
        %198 = vadd.xlane.f32.xlu0 %v197
        %v199 = vpop.xlane.xlu0 %198
        %v200 = vadd.f32 %v199, 1e-05
        %v201 = vrsqrt.pop %v200
        %v202 = vmul.f32 %v200, %v201
        %vm203 = vcmp.eq.f32.partialorder %v200, inf
        %v204 = vsel %vm203, %v200, %v202
        %vm205 = vcmp.eq.f32.partialorder %v200, 0.0
        %v206 = vand.u32 %v200, 2147483648
        %v207 = vsel %vm205, %v206, %v204
        %v208 = vmul.f32 %v207, %v188
        %v209 = vmul.f32 %v208, %v208
        %vm210 = vcmask 3072
        %v211 = vsel %vm210, %v209, 0.0
        %v212 = vrot.slane %v211, 4
        %v213 = vadd.f32 %v211, %v212
        %v214 = vrot.slane %v213, 2
        %v215 = vadd.f32 %v213, %v214
        %v216 = vrot.slane %v215, 1
        %v217 = vadd.f32 %v215, %v216
        %v218 = vrcp.pop 4.0
        %v219 = vmul.f32 %v217, %v218
        %v220 = vadd.f32 %v219, 1e-05
        %v221 = vrsqrt.pop %v220
        %v222 = vmul.f32 %v220, %v221
        %vm223 = vcmp.eq.f32.partialorder %v220, inf
        %v224 = vsel %vm223, %v220, %v222
        %vm225 = vcmp.eq.f32.partialorder %v220, 0.0
        %v226 = vand.u32 %v220, 2147483648
        %v227 = vsel %vm225, %v226, %v224
        %v228 = vmul.f32 %v208, %v227
        %v229 = vadd.f32 %v228, %v189
        %v230 = vtanh.pop %v229
        %232 = vset.pattern.permute.xlu0 0
        %233 = vperm.xlu0 %232, %v230
        %v234 = vpop.permute.xlu0 %233
        %v236 = vunpack.c.l.s4 839922192
        %v237 = vunpack.c.0.s8 %v236
        %v238 = vlaneseq
        %v239 = vshrl.u32 %v238, 7
        %v240 = vsub.s32 %v237, %v239
        %v241 = vrot.slane %v234, %v240
        %v243 = vadd.f32 %v187, %v241
        %244 = vst [vmem:[%s186] sm:$0xff] %v243
        %s245 = sand.u32 %s96, 1
        %s246 = scalar_lea.sflag [#allocation4], %s245
        %s247 = sand.u32 %s96, 1
        %s248 = smul.addr %s247, 8
        %s249 = scalar_lea.vmem [#allocation5], %s248
        // Predicated region
        $region37: #{tpu_custom_call.1} parent=31 // pred_check
          %p250 = pneg %p106
        $region38: #{tpu_custom_call.1} parent=31 // pred_check_branch
          %252 = sbr.rel (%p250) target = $region40
        $region39: #{tpu_custom_call.1} parent=31 // pred_region
          %s254 = ssub.s32 128, 128
          %255 = vsyncadd %s246, %s254
          %s256 = smul.addr %s20, 2
          %s257 = smul.addr %s256, 64
          %s258 = scalar_lea.hbm %s3, %s257
          %s260 = sshll.u32 %s249, 4
          %s261 = int_to_ptr.vmem [resolvable:$true] %s260
          %263 = dma.vmem_to_hbm [thread:$0]  %s261, 128, %s258, %s246
        $region40: #{tpu_custom_call.1} parent=31 // pred_fallthru
          _
      $region32: #{tpu_custom_call.1} parent=5 // pred_fallthru
        _
      %p264 = scmp.le.s32.totalorder 2, %s15
      // Predicated region
      $region41: #{tpu_custom_call.1} parent=5 // pred_check
        %p265 = pneg %p264
      $region42: #{tpu_custom_call.1} parent=5 // pred_check_branch
        %267 = sbr.rel (%p265) target = $region44
      $region43: #{tpu_custom_call.1} parent=5 // pred_region
        %s268 = ssub.s32 %s15, 2
        // Predicated region
        $region45: #{tpu_custom_call.1} parent=43 // pred_check
          %p269 = pneg %p112
        $region46: #{tpu_custom_call.1} parent=43 // pred_check_branch
          %271 = sbr.rel (%p269) target = $region48
        $region47: #{tpu_custom_call.1} parent=43 // pred_region
          %s272 = sand.u32 %s97, 1
          %s273 = scalar_lea.sflag [#allocation4], %s272
          %s274 = sand.u32 %s97, 1
          %s275 = smul.addr %s274, 8
          %s276 = scalar_lea.vmem [#allocation5], %s275
          %277 = dma.done %s273, 128
        $region48: #{tpu_custom_call.1} parent=43 // pred_fallthru
          _
      $region44: #{tpu_custom_call.1} parent=5 // pred_fallthru
        _
    $region6: #{tpu_custom_call.1} parent=1 // loop_footer
      %s19 = sadd.s32 1, %s15
    $region7: #{tpu_custom_call.1} parent=1 // loop_footer_branch
      %14 = sbr.rel target = $region3
    $region8: #{tpu_custom_call.1} parent=1 // loop_exit
      _
    %278 = vsyncpa [#allocation3], 1
    %s279 = scalar_lea.sflag [#allocation3], 1
    %280 = vsyncpa %s279, 1
    %281 = vsyncpa [#allocation4], 1
    %s282 = scalar_lea.sflag [#allocation4], 1
    %283 = vsyncpa %s282, 1

</llo_original>
